<compile_context>
chip_gen: v5e
topology: v5e:2x2
jax: 0.10.0
libtpu: 0.0.40
codegen_flags: <defaults>
</compile_context>

<pallas_src>
import jax
import jax.numpy as jnp
from jax.experimental import pallas as pl
from jax.experimental.pallas import tpu as pltpu


def _channel_attention_kernel(x_ref, w1t_ref, b1_ref, w2t_ref, b2_ref, o_ref):
    # x_ref block: (Nb, C, HW) in the input dtype (lane axis = HW, lane-dense).
    x = x_ref[...]

    # Global average pool over the spatial (lane) axis, accumulated in f32.
    pooled = jnp.mean(x, axis=-1, dtype=jnp.float32)            # (Nb, C)

    # Conv2d(C -> C/r, k=1) on a 1x1 map == (Nb, C) @ (C, Cr) matmul + bias.
    h = jnp.dot(pooled, w1t_ref[...],
                preferred_element_type=jnp.float32) + b1_ref[...]   # (Nb, Cr)
    # LeakyReLU(0.2)
    h = jnp.where(h >= 0, h, 0.2 * h)

    # Conv2d(C/r -> C, k=1)
    s = jnp.dot(h, w2t_ref[...],
                preferred_element_type=jnp.float32) + b2_ref[...]   # (Nb, C)
    score = jax.nn.sigmoid(s).astype(x.dtype)                       # (Nb, C)

    # Per-channel score broadcast over all spatial positions (lane broadcast).
    o_ref[...] = x * score[:, :, None]


def _pick_batch_block(n, per_image_block_bytes, budget_bytes=12 * 1024 * 1024):
    """Largest divisor Nb of n such that the 2-in/2-out pipelined blocks fit
    the smallest scoped-VMEM default, while keeping >=2 grid points (megacore)
    whenever n allows it."""
    best = 1
    for nb in range(1, n + 1):
        if n % nb != 0:
            continue
        if 4 * nb * per_image_block_bytes > budget_bytes:
            continue
        if n >= 2 and n // nb < 2:
            continue
        best = nb
    return best


def channel_attention(x, w1, b1, w2, b2):
    """x: (N, C, H, W).  w1: (Cr, C), b1: (Cr,), w2: (C, Cr), b2: (C,)."""
    N, C, H, W = x.shape
    Cr = w1.shape[0]
    HW = H * W

    # Lane-dense layout: flatten spatial dims in the wrapper (contiguous/free).
    x_flat = x.reshape(N, C, HW)

    # Pre-transpose weights so the kernel does (Nb, C) @ (C, Cr) matmuls.
    w1t = jnp.transpose(w1).astype(jnp.float32)    # (C, Cr)
    w2t = jnp.transpose(w2).astype(jnp.float32)    # (Cr, C)
    b1r = b1.reshape(1, Cr).astype(jnp.float32)
    b2r = b2.reshape(1, C).astype(jnp.float32)

    per_image_bytes = C * HW * x.dtype.itemsize
    Nb = _pick_batch_block(N, per_image_bytes)
    grid = (N // Nb,)

    grid_spec = pltpu.PrefetchScalarGridSpec(
        num_scalar_prefetch=0,
        grid=grid,
        in_specs=[
            pl.BlockSpec((Nb, C, HW), lambda n: (n, 0, 0)),
            pl.BlockSpec((C, Cr), lambda n: (0, 0)),
            pl.BlockSpec((1, Cr), lambda n: (0, 0)),
            pl.BlockSpec((Cr, C), lambda n: (0, 0)),
            pl.BlockSpec((1, C), lambda n: (0, 0)),
        ],
        out_specs=pl.BlockSpec((Nb, C, HW), lambda n: (n, 0, 0)),
    )

    out_flat = pl.pallas_call(
        _channel_attention_kernel,
        out_shape=jax.ShapeDtypeStruct((N, C, HW), x.dtype),
        grid_spec=grid_spec,
        compiler_params=pltpu.CompilerParams(
            dimension_semantics=("parallel",)),
    )(x_flat, w1t, b1r, w2t, b2r)

    return out_flat.reshape(N, C, H, W)


def channel_attention_ref(x, w1, b1, w2, b2):
    """Pure-JAX reference matching the PyTorch forward."""
    xf = x.astype(jnp.float32)
    mean = jnp.mean(xf, axis=(2, 3))                       # (N, C)
    h = mean @ w1.T + b1                                   # (N, Cr)
    h = jnp.where(h >= 0, h, 0.2 * h)
    s = jax.nn.sigmoid(h @ w2.T + b2)                      # (N, C)
    return (xf * s[:, :, None, None]).astype(x.dtype)


if __name__ == "__main__":
    N, C, H, W = 2, 256, 16, 16
    reduction = 8
    Cr = C // reduction

    key = jax.random.PRNGKey(0)
    kx, k1, kb1, k2, kb2 = jax.random.split(key, 5)

    x = jax.random.normal(kx, (N, C, H, W), dtype=jnp.float32)
    # Deterministic synthetic parameters (Conv2d 1x1 weights squeezed to 2D).
    w1 = 0.05 * jax.random.normal(k1, (Cr, C), dtype=jnp.float32)
    b1 = 0.01 * jax.random.normal(kb1, (Cr,), dtype=jnp.float32)
    w2 = 0.05 * jax.random.normal(k2, (C, Cr), dtype=jnp.float32)
    b2 = 0.01 * jax.random.normal(kb2, (C,), dtype=jnp.float32)

    out = channel_attention(x, w1, b1, w2, b2)
    out = jax.block_until_ready(out)

    ref = channel_attention_ref(x, w1, b1, w2, b2)
    assert out.shape == ref.shape == (N, C, H, W)
    assert jnp.allclose(out, ref, atol=1e-5, rtol=1e-5), "mismatch vs reference"

    print("KERNEL_OK")
</pallas_src>

<mosaic_0001>
module attributes {stable_mosaic.version = 11 : i64} {
  func.func @_channel_attention_kernel(%arg0: i32, %arg1: memref<1x256x256xf32, #tpu.memory_space<vmem>>, %arg2: memref<256x32xf32, #tpu.memory_space<vmem>>, %arg3: memref<1x32xf32, #tpu.memory_space<vmem>>, %arg4: memref<32x256xf32, #tpu.memory_space<vmem>>, %arg5: memref<1x256xf32, #tpu.memory_space<vmem>>, %arg6: memref<1x256x256xf32, #tpu.memory_space<vmem>>) attributes {dimension_semantics = [#tpu.dimension_semantics<parallel>], iteration_bounds = array<i64: 2>, scalar_prefetch = 0 : i64, scratch_operands = 0 : i64, tpu.core_type = #tpu.core_type<tc>, window_params = [{transform_indices = @transform_0, window_bounds = array<i64: 1, 256, 256>}, {pipeline_mode = #tpu.pipeline_mode<synchronous>, transform_indices = @transform_1, window_bounds = array<i64: 256, 32>}, {pipeline_mode = #tpu.pipeline_mode<synchronous>, transform_indices = @transform_2, window_bounds = array<i64: 1, 32>}, {pipeline_mode = #tpu.pipeline_mode<synchronous>, transform_indices = @transform_3, window_bounds = array<i64: 32, 256>}, {pipeline_mode = #tpu.pipeline_mode<synchronous>, transform_indices = @transform_4, window_bounds = array<i64: 1, 256>}, {transform_indices = @transform_5, window_bounds = array<i64: 1, 256, 256>}]} {
    %c0 = arith.constant 0 : index
    %c0_0 = arith.constant 0 : index
    %c0_1 = arith.constant 0 : index
    %0 = vector.load %arg1[%c0, %c0_0, %c0_1] : memref<1x256x256xf32, #tpu.memory_space<vmem>>, vector<1x256x256xf32>
    %cst = arith.constant dense<0.000000e+00> : vector<1x256xf32>
    %1 = vector.multi_reduction <add>, %0, %cst [2] : vector<1x256x256xf32> to vector<1x256xf32>
    %cst_2 = arith.constant 2.560000e+02 : f32
    %2 = vector.broadcast %cst_2 : f32 to vector<1x256xf32>
    %3 = arith.divf %1, %2 : vector<1x256xf32>
    %c0_3 = arith.constant 0 : index
    %c0_4 = arith.constant 0 : index
    %4 = vector.load %arg2[%c0_3, %c0_4] : memref<256x32xf32, #tpu.memory_space<vmem>>, vector<256x32xf32>
    %cst_5 = arith.constant dense<0.000000e+00> : vector<1x32xf32>
    %5 = tpu.matmul %3, %4, %cst_5 {dimension_numbers = #tpu.dot_dimension_numbers<[1], [0], [0], [1], [0, 0, 1, 1], [], []>} : vector<1x256xf32>, vector<256x32xf32>, vector<1x32xf32> -> vector<1x32xf32>
    %c0_6 = arith.constant 0 : index
    %c0_7 = arith.constant 0 : index
    %6 = vector.load %arg3[%c0_6, %c0_7] : memref<1x32xf32, #tpu.memory_space<vmem>>, vector<1x32xf32>
    %7 = arith.addf %5, %6 : vector<1x32xf32>
    %cst_8 = arith.constant 0.000000e+00 : f32
    %8 = vector.broadcast %cst_8 : f32 to vector<1x32xf32>
    %9 = arith.cmpf oge, %7, %8 : vector<1x32xf32>
    %cst_9 = arith.constant 2.000000e-01 : f32
    %10 = vector.broadcast %cst_9 : f32 to vector<1x32xf32>
    %11 = arith.mulf %10, %7 : vector<1x32xf32>
    %12 = arith.select %9, %7, %11 : vector<1x32xi1>, vector<1x32xf32>
    %c0_10 = arith.constant 0 : index
    %c0_11 = arith.constant 0 : index
    %13 = vector.load %arg4[%c0_10, %c0_11] : memref<32x256xf32, #tpu.memory_space<vmem>>, vector<32x256xf32>
    %cst_12 = arith.constant dense<0.000000e+00> : vector<1x256xf32>
    %14 = tpu.matmul %12, %13, %cst_12 {dimension_numbers = #tpu.dot_dimension_numbers<[1], [0], [0], [1], [0, 0, 1, 1], [], []>} : vector<1x32xf32>, vector<32x256xf32>, vector<1x256xf32> -> vector<1x256xf32>
    %c0_13 = arith.constant 0 : index
    %c0_14 = arith.constant 0 : index
    %15 = vector.load %arg5[%c0_13, %c0_14] : memref<1x256xf32, #tpu.memory_space<vmem>>, vector<1x256xf32>
    %16 = arith.addf %14, %15 : vector<1x256xf32>
    %17 = arith.negf %16 : vector<1x256xf32>
    %18 = math.exp %17 : vector<1x256xf32>
    %cst_15 = arith.constant 1.000000e+00 : f32
    %19 = vector.broadcast %cst_15 : f32 to vector<1x256xf32>
    %20 = arith.addf %19, %18 : vector<1x256xf32>
    %21 = arith.divf %19, %20 : vector<1x256xf32>
    %22 = vector.shape_cast %21 : vector<1x256xf32> to vector<1x256x1xf32>
    %23 = vector.broadcast %22 : vector<1x256x1xf32> to vector<1x256x256xf32>
    %24 = arith.mulf %0, %23 : vector<1x256x256xf32>
    %c0_16 = arith.constant 0 : index
    %c0_17 = arith.constant 0 : index
    %c0_18 = arith.constant 0 : index
    %25 = vector.load %arg6[%c0_16, %c0_17, %c0_18] : memref<1x256x256xf32, #tpu.memory_space<vmem>>, vector<1x256x256xf32>
    tpu.vector_store %arg6[%c0_16, %c0_17, %c0_18], %24 {strides = array<i32>} : memref<1x256x256xf32, #tpu.memory_space<vmem>>, vector<1x256x256xf32>,
    return
  }
  func.func @transform_0(%arg0: i32) -> (i32, i32, i32) {
    %c0_i32 = arith.constant 0 : i32
    %c0_i32_0 = arith.constant 0 : i32
    %c0_i32_1 = arith.constant 0 : i32
    return %arg0, %c0_i32, %c0_i32_0 : i32, i32, i32
  }
  func.func @transform_1(%arg0: i32) -> (i32, i32) {
    %c0_i32 = arith.constant 0 : i32
    %c0_i32_0 = arith.constant 0 : i32
    %c0_i32_1 = arith.constant 0 : i32
    return %c0_i32, %c0_i32_0 : i32, i32
  }
  func.func @transform_2(%arg0: i32) -> (i32, i32) {
    %c0_i32 = arith.constant 0 : i32
    %c0_i32_0 = arith.constant 0 : i32
    %c0_i32_1 = arith.constant 0 : i32
    return %c0_i32, %c0_i32_0 : i32, i32
  }
  func.func @transform_3(%arg0: i32) -> (i32, i32) {
    %c0_i32 = arith.constant 0 : i32
    %c0_i32_0 = arith.constant 0 : i32
    %c0_i32_1 = arith.constant 0 : i32
    return %c0_i32, %c0_i32_0 : i32, i32
  }
  func.func @transform_4(%arg0: i32) -> (i32, i32) {
    %c0_i32 = arith.constant 0 : i32
    %c0_i32_0 = arith.constant 0 : i32
    %c0_i32_1 = arith.constant 0 : i32
    return %c0_i32, %c0_i32_0 : i32, i32
  }
  func.func @transform_5(%arg0: i32) -> (i32, i32, i32) {
    %c0_i32 = arith.constant 0 : i32
    %c0_i32_0 = arith.constant 0 : i32
    %c0_i32_1 = arith.constant 0 : i32
    return %arg0, %c0_i32, %c0_i32_0 : i32, i32, i32
  }
}

</mosaic_0001>

<llo_original>
// kernel: tpu_custom_call.1
$region0: #{tpu_custom_call.1}
  #allocation0 [shape = 'u32[]', space=smem, size = 0x4, offset = 0x4, fixed_abs, tag = 'smem constant byte address 0x4 - core index']
  #allocation1 [shape = 'u32[72,128]{1,0:T(1,128)}', space=vmem, size = 0x9000, scoped, tag = 'internal scratch']
  %s0 = inlined_call_operand.hbm [shape: f32[2,256,256], index: 0, kind: input, shape index: {}]
  %s1 = inlined_call_operand.vmem [shape: f32[256,32], index: 1, kind: input, shape index: {}]
  %s2 = inlined_call_operand.vmem [shape: f32[1,32], index: 2, kind: input, shape index: {}]
  %s3 = inlined_call_operand.vmem [shape: f32[32,256], index: 3, kind: input, shape index: {}]
  %s4 = inlined_call_operand.vmem [shape: f32[1,256], index: 4, kind: input, shape index: {}]
  %s5 = inlined_call_operand.hbm [shape: f32[2,256,256], index: 5, kind: output, shape index: {}]
  %s6 = sld [smem:[#allocation0]]
  $region57: #{tpu_custom_call.1} parent=0
    _
  %s8 = ssub.s32 1, %s6
  %s9 = scalar_select 0, %s8, %s6
  $region1: #{tpu_custom_call.1} parent=0
    #allocation2 [shape = 'u8[524288]{0}', space=vmem, size = 0x80000, scoped, tag = 'input window, operand 0']
    #allocation3 [shape = 's32[2]{0}', space=sflag, size = 0x8, scoped, tag = 'scoped memory for tpu_custom_call.1']
    #allocation4 [shape = 's32[2]{0}', space=sflag, size = 0x8, scoped, tag = 'scoped memory for tpu_custom_call.1']
    #allocation5 [shape = 'u8[524288]{0}', space=vmem, size = 0x80000, scoped, tag = 'output window, operand 0']
    %10 = vsyncpa [#allocation3], 0
    %s11 = scalar_lea.sflag [#allocation3], 1
    %12 = vsyncpa %s11, 0
    %13 = vsyncpa [#allocation4], 0
    %s14 = scalar_lea.sflag [#allocation4], 1
    %15 = vsyncpa %s14, 0
    loop: start=0, step=1, limit=4
    $region2: #{tpu_custom_call.1} parent=1 // loop_pre_header
      _
    $region3: #{tpu_custom_call.1} parent=1 // loop_header
      %s17 = sphi 0, %s21
      %p18 = scmp.ge.s32.totalorder %s17, 4
      %s27 = sphi 0, %s29
      %s30 = sphi 0, %s27
      %s31 = sphi 0, %s30
      %s47 = sphi 0, %s31
      %s51 = sphi 0, %s51
      %s53 = sphi 0, %s51
      %s54 = sphi 0, %s53
      %s68 = sphi 0, %s54
      %s72 = sphi 0, %s72
      %s74 = sphi 0, %s72
      %s75 = sphi 0, %s74
      %s89 = sphi 0, %s75
      %s93 = sphi 0, %s93
      %s95 = sphi 0, %s93
      %s96 = sphi 0, %s95
      %s110 = sphi 0, %s96
      %s114 = sphi 0, %s114
      %s116 = sphi 0, %s114
      %s117 = sphi 0, %s116
      %s131 = sphi 0, %s117
      %s137 = sphi 0, %s139
      %s140 = sphi 0, %s137
      %s141 = sphi 0, %s140
      %s157 = sphi 0, %s141
    $region4: #{tpu_custom_call.1} parent=1 // loop_header_branch
      %20 = sbr.rel (%p18) target = $region8
    $region5: #{tpu_custom_call.1} parent=1 // loop_body
      %s22 = ssub.s32 %s17, 1
      %s23 = ssub.s32 %s17, 2
      %s24 = sadd.s32 %s17, 1
      %s25 = ssub.s32 %s17, %s24
      %p26 = scmp.eq.s32.totalorder %s25, 0
      %s28 = sadd.s32 %s27, 1
      %s29 = scalar_select %p26, %s27, %s28
      %p32 = pneg %p26
      %p33 = scmp.eq.s32.totalorder %s17, 1
      %p34 = por %p32, %p33
      %p35 = scmp.ne.s32.totalorder %s27, %s30
      %p36 = scmp.eq.s32.totalorder %s17, 0
      %p37 = por %p35, %p36
      %p38 = scmp.ne.s32.totalorder %s27, %s30
      %p39 = scmp.eq.s32.totalorder %s22, 1
      %p40 = por %p38, %p39
      %p41 = scmp.ne.s32.totalorder %s30, %s31
      %p42 = scmp.eq.s32.totalorder %s22, 0
      %p43 = por %p41, %p42
      %p44 = scmp.ne.s32.totalorder %s30, %s31
      %p45 = scmp.eq.s32.totalorder %s23, 1
      %p46 = por %p44, %p45
      %p48 = scmp.ne.s32.totalorder %s31, %s47
      %p49 = scmp.eq.s32.totalorder %s23, 0
      %p50 = por %p48, %p49
      %s52 = sadd.s32 %s51, 1
      %p55 = scmp.eq.s32.totalorder %s17, 1
      %p56 = scmp.ne.s32.totalorder %s51, %s53
      %p57 = scmp.eq.s32.totalorder %s17, 0
      %p58 = por %p56, %p57
      %p59 = scmp.ne.s32.totalorder %s51, %s53
      %p60 = scmp.eq.s32.totalorder %s22, 1
      %p61 = por %p59, %p60
      %p62 = scmp.ne.s32.totalorder %s53, %s54
      %p63 = scmp.eq.s32.totalorder %s22, 0
      %p64 = por %p62, %p63
      %p65 = scmp.ne.s32.totalorder %s53, %s54
      %p66 = scmp.eq.s32.totalorder %s23, 1
      %p67 = por %p65, %p66
      %p69 = scmp.ne.s32.totalorder %s54, %s68
      %p70 = scmp.eq.s32.totalorder %s23, 0
      %p71 = por %p69, %p70
      %s73 = sadd.s32 %s72, 1
      %p76 = scmp.eq.s32.totalorder %s17, 1
      %p77 = scmp.ne.s32.totalorder %s72, %s74
      %p78 = scmp.eq.s32.totalorder %s17, 0
      %p79 = por %p77, %p78
      %p80 = scmp.ne.s32.totalorder %s72, %s74
      %p81 = scmp.eq.s32.totalorder %s22, 1
      %p82 = por %p80, %p81
      %p83 = scmp.ne.s32.totalorder %s74, %s75
      %p84 = scmp.eq.s32.totalorder %s22, 0
      %p85 = por %p83, %p84
      %p86 = scmp.ne.s32.totalorder %s74, %s75
      %p87 = scmp.eq.s32.totalorder %s23, 1
      %p88 = por %p86, %p87
      %p90 = scmp.ne.s32.totalorder %s75, %s89
      %p91 = scmp.eq.s32.totalorder %s23, 0
      %p92 = por %p90, %p91
      %s94 = sadd.s32 %s93, 1
      %p97 = scmp.eq.s32.totalorder %s17, 1
      %p98 = scmp.ne.s32.totalorder %s93, %s95
      %p99 = scmp.eq.s32.totalorder %s17, 0
      %p100 = por %p98, %p99
      %p101 = scmp.ne.s32.totalorder %s93, %s95
      %p102 = scmp.eq.s32.totalorder %s22, 1
      %p103 = por %p101, %p102
      %p104 = scmp.ne.s32.totalorder %s95, %s96
      %p105 = scmp.eq.s32.totalorder %s22, 0
      %p106 = por %p104, %p105
      %p107 = scmp.ne.s32.totalorder %s95, %s96
      %p108 = scmp.eq.s32.totalorder %s23, 1
      %p109 = por %p107, %p108
      %p111 = scmp.ne.s32.totalorder %s96, %s110
      %p112 = scmp.eq.s32.totalorder %s23, 0
      %p113 = por %p111, %p112
      %s115 = sadd.s32 %s114, 1
      %p118 = scmp.eq.s32.totalorder %s17, 1
      %p119 = scmp.ne.s32.totalorder %s114, %s116
      %p120 = scmp.eq.s32.totalorder %s17, 0
      %p121 = por %p119, %p120
      %p122 = scmp.ne.s32.totalorder %s114, %s116
      %p123 = scmp.eq.s32.totalorder %s22, 1
      %p124 = por %p122, %p123
      %p125 = scmp.ne.s32.totalorder %s116, %s117
      %p126 = scmp.eq.s32.totalorder %s22, 0
      %p127 = por %p125, %p126
      %p128 = scmp.ne.s32.totalorder %s116, %s117
      %p129 = scmp.eq.s32.totalorder %s23, 1
      %p130 = por %p128, %p129
      %p132 = scmp.ne.s32.totalorder %s117, %s131
      %p133 = scmp.eq.s32.totalorder %s23, 0
      %p134 = por %p132, %p133
      %s135 = ssub.s32 %s17, %s24
      %p136 = scmp.eq.s32.totalorder %s135, 0
      %s138 = sadd.s32 %s137, 1
      %s139 = scalar_select %p136, %s137, %s138
      %p142 = pneg %p136
      %p143 = scmp.eq.s32.totalorder %s17, 1
      %p144 = por %p142, %p143
      %p145 = scmp.ne.s32.totalorder %s137, %s140
      %p146 = scmp.eq.s32.totalorder %s17, 0
      %p147 = por %p145, %p146
      %p148 = scmp.ne.s32.totalorder %s137, %s140
      %p149 = scmp.eq.s32.totalorder %s22, 1
      %p150 = por %p148, %p149
      %p151 = scmp.ne.s32.totalorder %s140, %s141
      %p152 = scmp.eq.s32.totalorder %s22, 0
      %p153 = por %p151, %p152
      %p154 = scmp.ne.s32.totalorder %s140, %s141
      %p155 = scmp.eq.s32.totalorder %s23, 1
      %p156 = por %p154, %p155
      %p158 = scmp.ne.s32.totalorder %s141, %s157
      %p159 = scmp.eq.s32.totalorder %s23, 0
      %p160 = por %p158, %p159
      %p161 = scmp.le.s32.totalorder 1, %s17
      %p162 = scmp.lt.s32.totalorder %s17, 3
      %p163 = pnand %p161, %p162
      %p164 = pneg %p163
      // Predicated region
      $region9: #{tpu_custom_call.1} parent=5 // pred_check
        _
      $region10: #{tpu_custom_call.1} parent=5 // pred_check_branch
        %166 = sbr.rel (%p163) target = $region12
      $region11: #{tpu_custom_call.1} parent=5 // pred_region
        %s167 = ssub.s32 %s17, 1
        // Predicated region
        $region13: #{tpu_custom_call.1} parent=11 // pred_check
          %p168 = pneg %p64
        $region14: #{tpu_custom_call.1} parent=11 // pred_check_branch
          %170 = sbr.rel (%p168) target = $region16
        $region15: #{tpu_custom_call.1} parent=11 // pred_region
          _
        $region16: #{tpu_custom_call.1} parent=11 // pred_fallthru
          _
        // Predicated region
        $region17: #{tpu_custom_call.1} parent=11 // pred_check
          %p171 = pneg %p85
        $region18: #{tpu_custom_call.1} parent=11 // pred_check_branch
          %173 = sbr.rel (%p171) target = $region20
        $region19: #{tpu_custom_call.1} parent=11 // pred_region
          _
        $region20: #{tpu_custom_call.1} parent=11 // pred_fallthru
          _
        // Predicated region
        $region21: #{tpu_custom_call.1} parent=11 // pred_check
          %p174 = pneg %p106
        $region22: #{tpu_custom_call.1} parent=11 // pred_check_branch
          %176 = sbr.rel (%p174) target = $region24
        $region23: #{tpu_custom_call.1} parent=11 // pred_region
          _
        $region24: #{tpu_custom_call.1} parent=11 // pred_fallthru
          _
        // Predicated region
        $region25: #{tpu_custom_call.1} parent=11 // pred_check
          %p177 = pneg %p127
        $region26: #{tpu_custom_call.1} parent=11 // pred_check_branch
          %179 = sbr.rel (%p177) target = $region28
        $region27: #{tpu_custom_call.1} parent=11 // pred_region
          _
        $region28: #{tpu_custom_call.1} parent=11 // pred_fallthru
          _
      $region12: #{tpu_custom_call.1} parent=5 // pred_fallthru
        _
      %p180 = scmp.lt.s32.totalorder %s17, 2
      // Predicated region
      $region29: #{tpu_custom_call.1} parent=5 // pred_check
        %p181 = pneg %p180
      $region30: #{tpu_custom_call.1} parent=5 // pred_check_branch
        %183 = sbr.rel (%p181) target = $region32
      $region31: #{tpu_custom_call.1} parent=5 // pred_region
        // Predicated region
        $region33: #{tpu_custom_call.1} parent=31 // pred_check
          %p184 = pneg %p37
        $region34: #{tpu_custom_call.1} parent=31 // pred_check_branch
          %186 = sbr.rel (%p184) target = $region36
        $region35: #{tpu_custom_call.1} parent=31 // pred_region
          %s187 = sand.u32 %s27, 1
          %s188 = scalar_lea.sflag [#allocation3], %s187
          %s189 = sand.u32 %s27, 1
          %s190 = smul.addr %s189, 512
          %s191 = scalar_lea.vmem [#allocation2], %s190
          %193 = vsyncadd %s188, 0
          %s194 = smul.addr %s17, 64
          %s195 = smul.addr %s194, 8
          %s196 = scalar_lea.hbm %s0, %s195
          %s197 = sshll.u32 %s196, 4
          %s198 = int_to_ptr.hbm [resolvable:$true] %s197
          %s199 = sshll.u32 %s191, 4
          %s200 = int_to_ptr.vmem [resolvable:$true] %s199
          %205 = dma.hbm_to_vmem [thread:$0]  %s198, 8192, %s200, %s188, 256, 256, 16
        $region36: #{tpu_custom_call.1} parent=31 // pred_fallthru
          _
      $region32: #{tpu_custom_call.1} parent=5 // pred_fallthru
        _
      %p206 = scmp.le.s32.totalorder 1, %s17
      %p207 = scmp.lt.s32.totalorder %s17, 3
      %p208 = pnand %p206, %p207
      %p209 = pneg %p208
      // Predicated region
      $region37: #{tpu_custom_call.1} parent=5 // pred_check
        _
      $region38: #{tpu_custom_call.1} parent=5 // pred_check_branch
        %211 = sbr.rel (%p208) target = $region40
      $region39: #{tpu_custom_call.1} parent=5 // pred_region
        %s212 = ssub.s32 %s17, 1
        %s213 = sand.u32 %s30, 1
        %s214 = scalar_lea.sflag [#allocation3], %s213
        %s215 = sand.u32 %s30, 1
        %s216 = smul.addr %s215, 512
        %s217 = scalar_lea.vmem [#allocation2], %s216
        // Predicated region
        $region41: #{tpu_custom_call.1} parent=39 // pred_check
          %p218 = pneg %p43
        $region42: #{tpu_custom_call.1} parent=39 // pred_check_branch
          %220 = sbr.rel (%p218) target = $region44
        $region43: #{tpu_custom_call.1} parent=39 // pred_region
          %222 = dma.done %s214, 8192
        $region44: #{tpu_custom_call.1} parent=39 // pred_fallthru
          _
        %s223 = sand.u32 %s30, 1
        %s224 = scalar_lea.sflag [#allocation3], %s223
        %s225 = sand.u32 %s30, 1
        %s226 = smul.addr %s225, 512
        %s227 = scalar_lea.vmem [#allocation2], %s226
        %p228 = pneg %p43
        %p229 = pneg %p40
        %p230 = pneg %p64
        %p231 = pneg %p61
        %p232 = pneg %p85
        %p233 = pneg %p82
        %p234 = pneg %p106
        %p235 = pneg %p103
        %p236 = pneg %p127
        %p237 = pneg %p124
        %p238 = pneg %p153
        %p239 = pneg %p150
        %s240 = sand.u32 %s140, 1
        %s241 = scalar_lea.sflag [#allocation4], %s240
        %s242 = sand.u32 %s140, 1
        %s243 = smul.addr %s242, 512
        %s244 = scalar_lea.vmem [#allocation5], %s243
        %v245 = vld [vmem:[%s217] sm:$0xff]
        %v246 = vld [vmem:[%s217 + $0x8] sm:$0xff]
        %v247 = vld [vmem:[%s217 + $0x10] sm:$0xff]
        %v248 = vld [vmem:[%s217 + $0x18] sm:$0xff]
        %v249 = vld [vmem:[%s217 + $0x20] sm:$0xff]
        %v250 = vld [vmem:[%s217 + $0x28] sm:$0xff]
        %v251 = vld [vmem:[%s217 + $0x30] sm:$0xff]
        %v252 = vld [vmem:[%s217 + $0x38] sm:$0xff]
        %v253 = vld [vmem:[%s217 + $0x40] sm:$0xff]
        %v254 = vld [vmem:[%s217 + $0x48] sm:$0xff]
        %v255 = vld [vmem:[%s217 + $0x50] sm:$0xff]
        %v256 = vld [vmem:[%s217 + $0x58] sm:$0xff]
        %v257 = vld [vmem:[%s217 + $0x60] sm:$0xff]
        %v258 = vld [vmem:[%s217 + $0x68] sm:$0xff]
        %v259 = vld [vmem:[%s217 + $0x70] sm:$0xff]
        %v260 = vld [vmem:[%s217 + $0x78] sm:$0xff]
        %v261 = vld [vmem:[%s217 + $0x80] sm:$0xff]
        %v262 = vld [vmem:[%s217 + $0x88] sm:$0xff]
        %v263 = vld [vmem:[%s217 + $0x90] sm:$0xff]
        %v264 = vld [vmem:[%s217 + $0x98] sm:$0xff]
        %v265 = vld [vmem:[%s217 + $0xa0] sm:$0xff]
        %v266 = vld [vmem:[%s217 + $0xa8] sm:$0xff]
        %v267 = vld [vmem:[%s217 + $0xb0] sm:$0xff]
        %v268 = vld [vmem:[%s217 + $0xb8] sm:$0xff]
        %v269 = vld [vmem:[%s217 + $0xc0] sm:$0xff]
        %v270 = vld [vmem:[%s217 + $0xc8] sm:$0xff]
        %v271 = vld [vmem:[%s217 + $0xd0] sm:$0xff]
        %v272 = vld [vmem:[%s217 + $0xd8] sm:$0xff]
        %v273 = vld [vmem:[%s217 + $0xe0] sm:$0xff]
        %v274 = vld [vmem:[%s217 + $0xe8] sm:$0xff]
        %v275 = vld [vmem:[%s217 + $0xf0] sm:$0xff]
        %v276 = vld [vmem:[%s217 + $0xf8] sm:$0xff]
        %v277 = vld [vmem:[%s217 + $0x100] sm:$0xff]
        %v278 = vld [vmem:[%s217 + $0x108] sm:$0xff]
        %v279 = vld [vmem:[%s217 + $0x110] sm:$0xff]
        %v280 = vld [vmem:[%s217 + $0x118] sm:$0xff]
        %v281 = vld [vmem:[%s217 + $0x120] sm:$0xff]
        %v282 = vld [vmem:[%s217 + $0x128] sm:$0xff]
        %v283 = vld [vmem:[%s217 + $0x130] sm:$0xff]
        %v284 = vld [vmem:[%s217 + $0x138] sm:$0xff]
        %v285 = vld [vmem:[%s217 + $0x140] sm:$0xff]
        %v286 = vld [vmem:[%s217 + $0x148] sm:$0xff]
        %v287 = vld [vmem:[%s217 + $0x150] sm:$0xff]
        %v288 = vld [vmem:[%s217 + $0x158] sm:$0xff]
        %v289 = vld [vmem:[%s217 + $0x160] sm:$0xff]
        %v290 = vld [vmem:[%s217 + $0x168] sm:$0xff]
        %v291 = vld [vmem:[%s217 + $0x170] sm:$0xff]
        %v292 = vld [vmem:[%s217 + $0x178] sm:$0xff]
        %v293 = vld [vmem:[%s217 + $0x180] sm:$0xff]
        %v294 = vld [vmem:[%s217 + $0x188] sm:$0xff]
        %v295 = vld [vmem:[%s217 + $0x190] sm:$0xff]
        %v296 = vld [vmem:[%s217 + $0x198] sm:$0xff]
        %v297 = vld [vmem:[%s217 + $0x1a0] sm:$0xff]
        %v298 = vld [vmem:[%s217 + $0x1a8] sm:$0xff]
        %v299 = vld [vmem:[%s217 + $0x1b0] sm:$0xff]
        %v300 = vld [vmem:[%s217 + $0x1b8] sm:$0xff]
        %v301 = vld [vmem:[%s217 + $0x1c0] sm:$0xff]
        %v302 = vld [vmem:[%s217 + $0x1c8] sm:$0xff]
        %v303 = vld [vmem:[%s217 + $0x1d0] sm:$0xff]
        %v304 = vld [vmem:[%s217 + $0x1d8] sm:$0xff]
        %v305 = vld [vmem:[%s217 + $0x1e0] sm:$0xff]
        %v306 = vld [vmem:[%s217 + $0x1e8] sm:$0xff]
        %v307 = vld [vmem:[%s217 + $0x1f0] sm:$0xff]
        %v308 = vld [vmem:[%s217 + $0x1f8] sm:$0xff]
        %v309 = vadd.f32 %v245, %v246
        %310 = vadd.xlane.f32.xlu0 %v309
        %v311 = vpop.xlane.xlu0 %310
        %v312 = vadd.f32 %v247, %v248
        %313 = vadd.xlane.f32.xlu0 %v312
        %v314 = vpop.xlane.xlu0 %313
        %v315 = vadd.f32 %v249, %v250
        %316 = vadd.xlane.f32.xlu0 %v315
        %v317 = vpop.xlane.xlu0 %316
        %v318 = vadd.f32 %v251, %v252
        %319 = vadd.xlane.f32.xlu0 %v318
        %v320 = vpop.xlane.xlu0 %319
        %v321 = vadd.f32 %v253, %v254
        %322 = vadd.xlane.f32.xlu0 %v321
        %v323 = vpop.xlane.xlu0 %322
        %v324 = vadd.f32 %v255, %v256
        %325 = vadd.xlane.f32.xlu0 %v324
        %v326 = vpop.xlane.xlu0 %325
        %v327 = vadd.f32 %v257, %v258
        %328 = vadd.xlane.f32.xlu0 %v327
        %v329 = vpop.xlane.xlu0 %328
        %v330 = vadd.f32 %v259, %v260
        %331 = vadd.xlane.f32.xlu0 %v330
        %v332 = vpop.xlane.xlu0 %331
        %v333 = vadd.f32 %v261, %v262
        %334 = vadd.xlane.f32.xlu0 %v333
        %v335 = vpop.xlane.xlu0 %334
        %v336 = vadd.f32 %v263, %v264
        %337 = vadd.xlane.f32.xlu0 %v336
        %v338 = vpop.xlane.xlu0 %337
        %v339 = vadd.f32 %v265, %v266
        %340 = vadd.xlane.f32.xlu0 %v339
        %v341 = vpop.xlane.xlu0 %340
        %v342 = vadd.f32 %v267, %v268
        %343 = vadd.xlane.f32.xlu0 %v342
        %v344 = vpop.xlane.xlu0 %343
        %v345 = vadd.f32 %v269, %v270
        %346 = vadd.xlane.f32.xlu0 %v345
        %v347 = vpop.xlane.xlu0 %346
        %v348 = vadd.f32 %v271, %v272
        %349 = vadd.xlane.f32.xlu0 %v348
        %v350 = vpop.xlane.xlu0 %349
        %v351 = vadd.f32 %v273, %v274
        %352 = vadd.xlane.f32.xlu0 %v351
        %v353 = vpop.xlane.xlu0 %352
        %v354 = vadd.f32 %v275, %v276
        %355 = vadd.xlane.f32.xlu0 %v354
        %v356 = vpop.xlane.xlu0 %355
        %v357 = vadd.f32 %v277, %v278
        %358 = vadd.xlane.f32.xlu0 %v357
        %v359 = vpop.xlane.xlu0 %358
        %v360 = vadd.f32 %v279, %v280
        %361 = vadd.xlane.f32.xlu0 %v360
        %v362 = vpop.xlane.xlu0 %361
        %v363 = vadd.f32 %v281, %v282
        %364 = vadd.xlane.f32.xlu0 %v363
        %v365 = vpop.xlane.xlu0 %364
        %v366 = vadd.f32 %v283, %v284
        %367 = vadd.xlane.f32.xlu0 %v366
        %v368 = vpop.xlane.xlu0 %367
        %v369 = vadd.f32 %v285, %v286
        %370 = vadd.xlane.f32.xlu0 %v369
        %v371 = vpop.xlane.xlu0 %370
        %v372 = vadd.f32 %v287, %v288
        %373 = vadd.xlane.f32.xlu0 %v372
        %v374 = vpop.xlane.xlu0 %373
        %v375 = vadd.f32 %v289, %v290
        %376 = vadd.xlane.f32.xlu0 %v375
        %v377 = vpop.xlane.xlu0 %376
        %v378 = vadd.f32 %v291, %v292
        %379 = vadd.xlane.f32.xlu0 %v378
        %v380 = vpop.xlane.xlu0 %379
        %v381 = vadd.f32 %v293, %v294
        %382 = vadd.xlane.f32.xlu0 %v381
        %v383 = vpop.xlane.xlu0 %382
        %v384 = vadd.f32 %v295, %v296
        %385 = vadd.xlane.f32.xlu0 %v384
        %v386 = vpop.xlane.xlu0 %385
        %v387 = vadd.f32 %v297, %v298
        %388 = vadd.xlane.f32.xlu0 %v387
        %v389 = vpop.xlane.xlu0 %388
        %v390 = vadd.f32 %v299, %v300
        %391 = vadd.xlane.f32.xlu0 %v390
        %v392 = vpop.xlane.xlu0 %391
        %v393 = vadd.f32 %v301, %v302
        %394 = vadd.xlane.f32.xlu0 %v393
        %v395 = vpop.xlane.xlu0 %394
        %v396 = vadd.f32 %v303, %v304
        %397 = vadd.xlane.f32.xlu0 %v396
        %v398 = vpop.xlane.xlu0 %397
        %v399 = vadd.f32 %v305, %v306
        %400 = vadd.xlane.f32.xlu0 %v399
        %v401 = vpop.xlane.xlu0 %400
        %v402 = vadd.f32 %v307, %v308
        %403 = vadd.xlane.f32.xlu0 %v402
        %v404 = vpop.xlane.xlu0 %403
        %v405 = vrcp.pop 256.0
        %v406 = vmul.f32 256.0, %v405
        %v407 = vsub.f32 1.0, %v406
        %v408 = vmul.f32 %v405, %v407
        %v409 = vadd.f32 %v405, %v408
        %vm410 = vweird.f32 %v405
        %v411 = vsel %vm410, %v405, %v409
        %v412 = vmul.f32 %v311, %v411
        %v413 = vmul.f32 %v314, %v411
        %v414 = vmul.f32 %v317, %v411
        %v415 = vmul.f32 %v320, %v411
        %v416 = vmul.f32 %v323, %v411
        %v417 = vmul.f32 %v326, %v411
        %v418 = vmul.f32 %v329, %v411
        %v419 = vmul.f32 %v332, %v411
        %v420 = vmul.f32 %v335, %v411
        %v421 = vmul.f32 %v338, %v411
        %v422 = vmul.f32 %v341, %v411
        %v423 = vmul.f32 %v344, %v411
        %v424 = vmul.f32 %v347, %v411
        %v425 = vmul.f32 %v350, %v411
        %v426 = vmul.f32 %v353, %v411
        %v427 = vmul.f32 %v356, %v411
        %v428 = vmul.f32 %v359, %v411
        %v429 = vmul.f32 %v362, %v411
        %v430 = vmul.f32 %v365, %v411
        %v431 = vmul.f32 %v368, %v411
        %v432 = vmul.f32 %v371, %v411
        %v433 = vmul.f32 %v374, %v411
        %v434 = vmul.f32 %v377, %v411
        %v435 = vmul.f32 %v380, %v411
        %v436 = vmul.f32 %v383, %v411
        %v437 = vmul.f32 %v386, %v411
        %v438 = vmul.f32 %v389, %v411
        %v439 = vmul.f32 %v392, %v411
        %v440 = vmul.f32 %v395, %v411
        %v441 = vmul.f32 %v398, %v411
        %v442 = vmul.f32 %v401, %v411
        %v443 = vmul.f32 %v404, %v411
        %v444 = vld [vmem:[%s1] sm:$0xff]
        %v445 = vld [vmem:[%s1 + $0x8] sm:$0xff]
        %v446 = vld [vmem:[%s1 + $0x10] sm:$0xff]
        %v447 = vld [vmem:[%s1 + $0x18] sm:$0xff]
        %v448 = vld [vmem:[%s1 + $0x20] sm:$0xff]
        %v449 = vld [vmem:[%s1 + $0x28] sm:$0xff]
        %v450 = vld [vmem:[%s1 + $0x30] sm:$0xff]
        %v451 = vld [vmem:[%s1 + $0x38] sm:$0xff]
        %v452 = vld [vmem:[%s1 + $0x40] sm:$0xff]
        %v453 = vld [vmem:[%s1 + $0x48] sm:$0xff]
        %v454 = vld [vmem:[%s1 + $0x50] sm:$0xff]
        %v455 = vld [vmem:[%s1 + $0x58] sm:$0xff]
        %v456 = vld [vmem:[%s1 + $0x60] sm:$0xff]
        %v457 = vld [vmem:[%s1 + $0x68] sm:$0xff]
        %v458 = vld [vmem:[%s1 + $0x70] sm:$0xff]
        %v459 = vld [vmem:[%s1 + $0x78] sm:$0xff]
        %v460 = vld [vmem:[%s1 + $0x80] sm:$0xff]
        %v461 = vld [vmem:[%s1 + $0x88] sm:$0xff]
        %v462 = vld [vmem:[%s1 + $0x90] sm:$0xff]
        %v463 = vld [vmem:[%s1 + $0x98] sm:$0xff]
        %v464 = vld [vmem:[%s1 + $0xa0] sm:$0xff]
        %v465 = vld [vmem:[%s1 + $0xa8] sm:$0xff]
        %v466 = vld [vmem:[%s1 + $0xb0] sm:$0xff]
        %v467 = vld [vmem:[%s1 + $0xb8] sm:$0xff]
        %v468 = vld [vmem:[%s1 + $0xc0] sm:$0xff]
        %v469 = vld [vmem:[%s1 + $0xc8] sm:$0xff]
        %v470 = vld [vmem:[%s1 + $0xd0] sm:$0xff]
        %v471 = vld [vmem:[%s1 + $0xd8] sm:$0xff]
        %v472 = vld [vmem:[%s1 + $0xe0] sm:$0xff]
        %v473 = vld [vmem:[%s1 + $0xe8] sm:$0xff]
        %v474 = vld [vmem:[%s1 + $0xf0] sm:$0xff]
        %v475 = vld [vmem:[%s1 + $0xf8] sm:$0xff]
        %v476 = vld [vmem:[%s2] sm:$0x1]
        %v509 = vlaneseq
        %v510 = vand.u32 %v509, 127
        %v511 = vperm.slane %v412, %v510
        %v512 = vadd.s32 %v510, 4294967288
        %v513 = vperm.slane %v413, %v512
        %vm514 = vcmask 130112
        %v515 = vsel %vm514, %v513, %v511
        %v516 = vadd.s32 %v510, 4294967280
        %v517 = vperm.slane %v414, %v516
        %vm518 = vcmask 195712
        %v519 = vsel %vm518, %v517, %v515
        %v520 = vadd.s32 %v510, 4294967272
        %v521 = vperm.slane %v415, %v520
        %vm522 = vcmask 261312
        %v523 = vsel %vm522, %v521, %v519
        %v524 = vadd.s32 %v510, 4294967264
        %v525 = vperm.slane %v416, %v524
        %vm526 = vcmask 326912
        %v527 = vsel %vm526, %v525, %v523
        %v528 = vadd.s32 %v510, 4294967256
        %v529 = vperm.slane %v417, %v528
        %vm530 = vcmask 392512
        %v531 = vsel %vm530, %v529, %v527
        %v532 = vadd.s32 %v510, 4294967248
        %v533 = vperm.slane %v418, %v532
        %vm534 = vcmask 458112
        %v535 = vsel %vm534, %v533, %v531
        %v536 = vadd.s32 %v510, 4294967240
        %v537 = vperm.slane %v419, %v536
        %vm538 = vcmask 523712
        %v539 = vsel %vm538, %v537, %v535
        %v540 = vadd.s32 %v510, 4294967232
        %v541 = vperm.slane %v420, %v540
        %vm542 = vcmask 589312
        %v543 = vsel %vm542, %v541, %v539
        %v544 = vadd.s32 %v510, 4294967224
        %v545 = vperm.slane %v421, %v544
        %vm546 = vcmask 654912
        %v547 = vsel %vm546, %v545, %v543
        %v548 = vadd.s32 %v510, 4294967216
        %v549 = vperm.slane %v422, %v548
        %vm550 = vcmask 720512
        %v551 = vsel %vm550, %v549, %v547
        %v552 = vadd.s32 %v510, 4294967208
        %v553 = vperm.slane %v423, %v552
        %vm554 = vcmask 786112
        %v555 = vsel %vm554, %v553, %v551
        %v556 = vadd.s32 %v510, 4294967200
        %v557 = vperm.slane %v424, %v556
        %vm558 = vcmask 851712
        %v559 = vsel %vm558, %v557, %v555
        %v560 = vadd.s32 %v510, 4294967192
        %v561 = vperm.slane %v425, %v560
        %vm562 = vcmask 917312
        %v563 = vsel %vm562, %v561, %v559
        %v564 = vadd.s32 %v510, 4294967184
        %v565 = vperm.slane %v426, %v564
        %vm566 = vcmask 982912
        %v567 = vsel %vm566, %v565, %v563
        %v568 = vadd.s32 %v510, 4294967176
        %v569 = vperm.slane %v427, %v568
        %vm570 = vcmask 1048512
        %v571 = vsel %vm570, %v569, %v567
        %v572 = vperm.slane %v428, %v510
        %v573 = vperm.slane %v429, %v512
        %v574 = vsel %vm514, %v573, %v572
        %v575 = vperm.slane %v430, %v516
        %v576 = vsel %vm518, %v575, %v574
        %v577 = vperm.slane %v431, %v520
        %v578 = vsel %vm522, %v577, %v576
        %v579 = vperm.slane %v432, %v524
        %v580 = vsel %vm526, %v579, %v578
        %v581 = vperm.slane %v433, %v528
        %v582 = vsel %vm530, %v581, %v580
        %v583 = vperm.slane %v434, %v532
        %v584 = vsel %vm534, %v583, %v582
        %v585 = vperm.slane %v435, %v536
        %v586 = vsel %vm538, %v585, %v584
        %v587 = vperm.slane %v436, %v540
        %v588 = vsel %vm542, %v587, %v586
        %v589 = vperm.slane %v437, %v544
        %v590 = vsel %vm546, %v589, %v588
        %v591 = vperm.slane %v438, %v548
        %v592 = vsel %vm550, %v591, %v590
        %v593 = vperm.slane %v439, %v552
        %v594 = vsel %vm554, %v593, %v592
        %v595 = vperm.slane %v440, %v556
        %v596 = vsel %vm558, %v595, %v594
        %v597 = vperm.slane %v441, %v560
        %v598 = vsel %vm562, %v597, %v596
        %v599 = vperm.slane %v442, %v564
        %v600 = vsel %vm566, %v599, %v598
        %v601 = vperm.slane %v443, %v568
        %v602 = vsel %vm570, %v601, %v600
        %605 = vmatpush.msra.mxu0 %v459
        %606 = vmatpush.msra.mxu0 %v458
        %607 = vmatpush.msra.mxu0 %v457
        %608 = vmatpush.msra.mxu0 %v456
        %609 = vmatpush.msra.mxu0 %v455
        %610 = vmatpush.msra.mxu0 %v454
        %611 = vmatpush.msra.mxu0 %v453
        %612 = vmatpush.msra.mxu0 %v452
        %613 = vmatpush.msra.mxu0 %v451
        %614 = vmatpush.msra.mxu0 %v450
        %615 = vmatpush.msra.mxu0 %v449
        %616 = vmatpush.msra.mxu0 %v448
        %617 = vmatpush.msra.mxu0 %v447
        %618 = vmatpush.msra.mxu0 %v446
        %619 = vmatpush.msra.mxu0 %v445
        %620 = vmatpush.msra.mxu0 %v444
        %621 = vmatmul.f32.gmra.mxu0 %v571
        %v622 = vpop.f32.mrf.mxu0
        %v623 = vadd.f32 %v476, %v622
        %624 = vdwg.mxu0
        %625 = vmatpush.msra.mxu0 %v475
        %626 = vmatpush.msra.mxu0 %v474
        %627 = vmatpush.msra.mxu0 %v473
        %628 = vmatpush.msra.mxu0 %v472
        %629 = vmatpush.msra.mxu0 %v471
        %630 = vmatpush.msra.mxu0 %v470
        %631 = vmatpush.msra.mxu0 %v469
        %632 = vmatpush.msra.mxu0 %v468
        %633 = vmatpush.msra.mxu0 %v467
        %634 = vmatpush.msra.mxu0 %v466
        %635 = vmatpush.msra.mxu0 %v465
        %636 = vmatpush.msra.mxu0 %v464
        %637 = vmatpush.msra.mxu0 %v463
        %638 = vmatpush.msra.mxu0 %v462
        %639 = vmatpush.msra.mxu0 %v461
        %640 = vmatpush.msra.mxu0 %v460
        %641 = vmatmul.f32.gmra.mxu0 %v602
        %v642 = vpop.f32.mrf.mxu0
        %v643 = vadd.f32 %v623, %v642
        %644 = vdwg.mxu0
        %vm645 = vcmp.ge.f32.partialorder %v643, 0.0
        %v646 = vmul.f32 %v643, 0.2
        %v647 = vsel %vm645, %v643, %v646
        %v648 = vld [vmem:[%s3] sm:$0xff]
        %v649 = vld [vmem:[%s3 + $0x8] sm:$0xff]
        %v650 = vld [vmem:[%s3 + $0x10] sm:$0xff]
        %v651 = vld [vmem:[%s3 + $0x18] sm:$0xff]
        %v652 = vld [vmem:[%s3 + $0x20] sm:$0xff]
        %v653 = vld [vmem:[%s3 + $0x28] sm:$0xff]
        %v654 = vld [vmem:[%s3 + $0x30] sm:$0xff]
        %v655 = vld [vmem:[%s3 + $0x38] sm:$0xff]
        %v656 = vld [vmem:[%s4] sm:$0x3]
        %v658 = vperm.slane %v656, 0
        %v659 = vperm.slane %v656, 1
        %vm662 = vcmask 261120
        %v664 = vsel %vm662, %v647, 0
        %666 = vmatpush.msra.mxu0 0.0
        %667 = vmatpush.msra.mxu0 0.0
        %668 = vmatpush.msra.mxu0 0.0
        %669 = vmatpush.msra.mxu0 0.0
        %670 = vmatpush.msra.mxu0 0.0
        %671 = vmatpush.msra.mxu0 0.0
        %672 = vmatpush.msra.mxu0 0.0
        %673 = vmatpush.msra.mxu0 0.0
        %674 = vmatpush.msra.mxu0 0.0
        %675 = vmatpush.msra.mxu0 0.0
        %676 = vmatpush.msra.mxu0 0.0
        %677 = vmatpush.msra.mxu0 0.0
        %678 = vmatpush.msra.mxu0 %v654
        %679 = vmatpush.msra.mxu0 %v652
        %680 = vmatpush.msra.mxu0 %v650
        %681 = vmatpush.msra.mxu0 %v648
        %682 = vmatmul.f32.gmra.mxu0 %v664
        %v683 = vpop.f32.mrf.mxu0
        %v684 = vadd.f32 %v658, %v683
        %685 = vdwg.mxu0
        %686 = vmatpush.msra.mxu0 0.0
        %687 = vmatpush.msra.mxu0 0.0
        %688 = vmatpush.msra.mxu0 0.0
        %689 = vmatpush.msra.mxu0 0.0
        %690 = vmatpush.msra.mxu0 0.0
        %691 = vmatpush.msra.mxu0 0.0
        %692 = vmatpush.msra.mxu0 0.0
        %693 = vmatpush.msra.mxu0 0.0
        %694 = vmatpush.msra.mxu0 0.0
        %695 = vmatpush.msra.mxu0 0.0
        %696 = vmatpush.msra.mxu0 0.0
        %697 = vmatpush.msra.mxu0 0.0
        %698 = vmatpush.msra.mxu0 %v655
        %699 = vmatpush.msra.mxu0 %v653
        %700 = vmatpush.msra.mxu0 %v651
        %701 = vmatpush.msra.mxu0 %v649
        %702 = vmatmul.f32.gmra.mxu0 %v664
        %v703 = vpop.f32.mrf.mxu0
        %v704 = vadd.f32 %v659, %v703
        %705 = vdwg.mxu0
        %v706 = vxor.u32 %v684, 2147483648
        %v707 = vxor.u32 %v704, 2147483648
        %v708 = vmul.f32 %v706, 1.442695
        %v709 = vpow.pop %v708
        %v710 = vmul.f32 %v707, 1.442695
        %v711 = vpow.pop %v710
        %v712 = vadd.f32 %v709, 1.0
        %v713 = vadd.f32 %v711, 1.0
        %v714 = vrcp.pop %v712
        %v715 = vmul.f32 %v712, %v714
        %v716 = vsub.f32 1.0, %v715
        %v717 = vmul.f32 %v714, %v716
        %v718 = vadd.f32 %v714, %v717
        %vm719 = vweird.f32 %v712
        %vm720 = vweird.f32 %v714
        %vm721 = vmor %vm719, %vm720
        %v722 = vsel %vm721, %v714, %v718
        %v723 = vand.u32 2147483647, %v712
        %vm724 = vcmp.eq.f32.partialorder %v723, 8.507059e+37
        %v725 = vand.u32 %v712, 2147483648
        %v726 = vor.u32 1.1754944e-38, %v725
        %v727 = vsel %vm724, %v726, %v722
        %v728 = vmul.f32 1.0, %v727
        %v729 = vrcp.pop %v713
        %v730 = vmul.f32 %v713, %v729
        %v731 = vsub.f32 1.0, %v730
        %v732 = vmul.f32 %v729, %v731
        %v733 = vadd.f32 %v729, %v732
        %vm734 = vweird.f32 %v713
        %vm735 = vweird.f32 %v729
        %vm736 = vmor %vm734, %vm735
        %v737 = vsel %vm736, %v729, %v733
        %v738 = vand.u32 2147483647, %v713
        %vm739 = vcmp.eq.f32.partialorder %v738, 8.507059e+37
        %v740 = vand.u32 %v713, 2147483648
        %v741 = vor.u32 1.1754944e-38, %v740
        %v742 = vsel %vm739, %v741, %v737
        %v743 = vmul.f32 1.0, %v742
        %v744 = vperm.slane %v728, 0
        %v745 = vlaneseq
        %v746 = vshrl.u32 %v745, 7
        %748 = vset.pattern.permute.xlu0 %v746
        %749 = vperm.xlu0 %748, %v744
        %v750 = vpop.permute.xlu0 %749
        %v751 = vlaneseq
        %v752 = vshrl.u32 %v751, 7
        %v753 = vadd.s32 %v752, 8
        %754 = vset.pattern.permute.xlu0 %v753
        %755 = vperm.xlu0 %754, %v744
        %v756 = vpop.permute.xlu0 %755
        %v757 = vlaneseq
        %v758 = vshrl.u32 %v757, 7
        %v759 = vadd.s32 %v758, 16
        %760 = vset.pattern.permute.xlu0 %v759
        %761 = vperm.xlu0 %760, %v744
        %v762 = vpop.permute.xlu0 %761
        %v763 = vlaneseq
        %v764 = vshrl.u32 %v763, 7
        %v765 = vadd.s32 %v764, 24
        %766 = vset.pattern.permute.xlu0 %v765
        %767 = vperm.xlu0 %766, %v744
        %v768 = vpop.permute.xlu0 %767
        %v769 = vlaneseq
        %v770 = vshrl.u32 %v769, 7
        %v771 = vadd.s32 %v770, 32
        %772 = vset.pattern.permute.xlu0 %v771
        %773 = vperm.xlu0 %772, %v744
        %v774 = vpop.permute.xlu0 %773
        %v775 = vlaneseq
        %v776 = vshrl.u32 %v775, 7
        %v777 = vadd.s32 %v776, 40
        %778 = vset.pattern.permute.xlu0 %v777
        %779 = vperm.xlu0 %778, %v744
        %v780 = vpop.permute.xlu0 %779
        %v781 = vlaneseq
        %v782 = vshrl.u32 %v781, 7
        %v783 = vadd.s32 %v782, 48
        %784 = vset.pattern.permute.xlu0 %v783
        %785 = vperm.xlu0 %784, %v744
        %v786 = vpop.permute.xlu0 %785
        %v787 = vlaneseq
        %v788 = vshrl.u32 %v787, 7
        %v789 = vadd.s32 %v788, 56
        %790 = vset.pattern.permute.xlu0 %v789
        %791 = vperm.xlu0 %790, %v744
        %v792 = vpop.permute.xlu0 %791
        %v793 = vlaneseq
        %v794 = vshrl.u32 %v793, 7
        %v795 = vadd.s32 %v794, 64
        %796 = vset.pattern.permute.xlu0 %v795
        %797 = vperm.xlu0 %796, %v744
        %v798 = vpop.permute.xlu0 %797
        %v799 = vlaneseq
        %v800 = vshrl.u32 %v799, 7
        %v801 = vadd.s32 %v800, 72
        %802 = vset.pattern.permute.xlu0 %v801
        %803 = vperm.xlu0 %802, %v744
        %v804 = vpop.permute.xlu0 %803
        %v805 = vlaneseq
        %v806 = vshrl.u32 %v805, 7
        %v807 = vadd.s32 %v806, 80
        %808 = vset.pattern.permute.xlu0 %v807
        %809 = vperm.xlu0 %808, %v744
        %v810 = vpop.permute.xlu0 %809
        %v811 = vlaneseq
        %v812 = vshrl.u32 %v811, 7
        %v813 = vadd.s32 %v812, 88
        %814 = vset.pattern.permute.xlu0 %v813
        %815 = vperm.xlu0 %814, %v744
        %v816 = vpop.permute.xlu0 %815
        %v817 = vlaneseq
        %v818 = vshrl.u32 %v817, 7
        %v819 = vadd.s32 %v818, 96
        %820 = vset.pattern.permute.xlu0 %v819
        %821 = vperm.xlu0 %820, %v744
        %v822 = vpop.permute.xlu0 %821
        %v823 = vlaneseq
        %v824 = vshrl.u32 %v823, 7
        %v825 = vadd.s32 %v824, 104
        %826 = vset.pattern.permute.xlu0 %v825
        %827 = vperm.xlu0 %826, %v744
        %v828 = vpop.permute.xlu0 %827
        %v829 = vlaneseq
        %v830 = vshrl.u32 %v829, 7
        %v831 = vadd.s32 %v830, 112
        %832 = vset.pattern.permute.xlu0 %v831
        %833 = vperm.xlu0 %832, %v744
        %v834 = vpop.permute.xlu0 %833
        %v835 = vlaneseq
        %v836 = vshrl.u32 %v835, 7
        %v837 = vadd.s32 %v836, 120
        %838 = vset.pattern.permute.xlu0 %v837
        %839 = vperm.xlu0 %838, %v744
        %v840 = vpop.permute.xlu0 %839
        %v841 = vperm.slane %v743, 0
        %v842 = vlaneseq
        %v843 = vshrl.u32 %v842, 7
        %845 = vset.pattern.permute.xlu0 %v843
        %846 = vperm.xlu0 %845, %v841
        %v847 = vpop.permute.xlu0 %846
        %v848 = vlaneseq
        %v849 = vshrl.u32 %v848, 7
        %v850 = vadd.s32 %v849, 8
        %851 = vset.pattern.permute.xlu0 %v850
        %852 = vperm.xlu0 %851, %v841
        %v853 = vpop.permute.xlu0 %852
        %v854 = vlaneseq
        %v855 = vshrl.u32 %v854, 7
        %v856 = vadd.s32 %v855, 16
        %857 = vset.pattern.permute.xlu0 %v856
        %858 = vperm.xlu0 %857, %v841
        %v859 = vpop.permute.xlu0 %858
        %v860 = vlaneseq
        %v861 = vshrl.u32 %v860, 7
        %v862 = vadd.s32 %v861, 24
        %863 = vset.pattern.permute.xlu0 %v862
        %864 = vperm.xlu0 %863, %v841
        %v865 = vpop.permute.xlu0 %864
        %v866 = vlaneseq
        %v867 = vshrl.u32 %v866, 7
        %v868 = vadd.s32 %v867, 32
        %869 = vset.pattern.permute.xlu0 %v868
        %870 = vperm.xlu0 %869, %v841
        %v871 = vpop.permute.xlu0 %870
        %v872 = vlaneseq
        %v873 = vshrl.u32 %v872, 7
        %v874 = vadd.s32 %v873, 40
        %875 = vset.pattern.permute.xlu0 %v874
        %876 = vperm.xlu0 %875, %v841
        %v877 = vpop.permute.xlu0 %876
        %v878 = vlaneseq
        %v879 = vshrl.u32 %v878, 7
        %v880 = vadd.s32 %v879, 48
        %881 = vset.pattern.permute.xlu0 %v880
        %882 = vperm.xlu0 %881, %v841
        %v883 = vpop.permute.xlu0 %882
        %v884 = vlaneseq
        %v885 = vshrl.u32 %v884, 7
        %v886 = vadd.s32 %v885, 56
        %887 = vset.pattern.permute.xlu0 %v886
        %888 = vperm.xlu0 %887, %v841
        %v889 = vpop.permute.xlu0 %888
        %v890 = vlaneseq
        %v891 = vshrl.u32 %v890, 7
        %v892 = vadd.s32 %v891, 64
        %893 = vset.pattern.permute.xlu0 %v892
        %894 = vperm.xlu0 %893, %v841
        %v895 = vpop.permute.xlu0 %894
        %v896 = vlaneseq
        %v897 = vshrl.u32 %v896, 7
        %v898 = vadd.s32 %v897, 72
        %899 = vset.pattern.permute.xlu0 %v898
        %900 = vperm.xlu0 %899, %v841
        %v901 = vpop.permute.xlu0 %900
        %v902 = vlaneseq
        %v903 = vshrl.u32 %v902, 7
        %v904 = vadd.s32 %v903, 80
        %905 = vset.pattern.permute.xlu0 %v904
        %906 = vperm.xlu0 %905, %v841
        %v907 = vpop.permute.xlu0 %906
        %v908 = vlaneseq
        %v909 = vshrl.u32 %v908, 7
        %v910 = vadd.s32 %v909, 88
        %911 = vset.pattern.permute.xlu0 %v910
        %912 = vperm.xlu0 %911, %v841
        %v913 = vpop.permute.xlu0 %912
        %v914 = vlaneseq
        %v915 = vshrl.u32 %v914, 7
        %v916 = vadd.s32 %v915, 96
        %917 = vset.pattern.permute.xlu0 %v916
        %918 = vperm.xlu0 %917, %v841
        %v919 = vpop.permute.xlu0 %918
        %v920 = vlaneseq
        %v921 = vshrl.u32 %v920, 7
        %v922 = vadd.s32 %v921, 104
        %923 = vset.pattern.permute.xlu0 %v922
        %924 = vperm.xlu0 %923, %v841
        %v925 = vpop.permute.xlu0 %924
        %v926 = vlaneseq
        %v927 = vshrl.u32 %v926, 7
        %v928 = vadd.s32 %v927, 112
        %929 = vset.pattern.permute.xlu0 %v928
        %930 = vperm.xlu0 %929, %v841
        %v931 = vpop.permute.xlu0 %930
        %v932 = vlaneseq
        %v933 = vshrl.u32 %v932, 7
        %v934 = vadd.s32 %v933, 120
        %935 = vset.pattern.permute.xlu0 %v934
        %936 = vperm.xlu0 %935, %v841
        %v937 = vpop.permute.xlu0 %936
        %v938 = vmul.f32 %v245, %v750
        %v939 = vmul.f32 %v246, %v750
        %v940 = vmul.f32 %v247, %v756
        %v941 = vmul.f32 %v248, %v756
        %v942 = vmul.f32 %v249, %v762
        %v943 = vmul.f32 %v250, %v762
        %v944 = vmul.f32 %v251, %v768
        %v945 = vmul.f32 %v252, %v768
        %v946 = vmul.f32 %v253, %v774
        %v947 = vmul.f32 %v254, %v774
        %v948 = vmul.f32 %v255, %v780
        %v949 = vmul.f32 %v256, %v780
        %v950 = vmul.f32 %v257, %v786
        %v951 = vmul.f32 %v258, %v786
        %v952 = vmul.f32 %v259, %v792
        %v953 = vmul.f32 %v260, %v792
        %v954 = vmul.f32 %v261, %v798
        %v955 = vmul.f32 %v262, %v798
        %v956 = vmul.f32 %v263, %v804
        %v957 = vmul.f32 %v264, %v804
        %v958 = vmul.f32 %v265, %v810
        %v959 = vmul.f32 %v266, %v810
        %v960 = vmul.f32 %v267, %v816
        %v961 = vmul.f32 %v268, %v816
        %v962 = vmul.f32 %v269, %v822
        %v963 = vmul.f32 %v270, %v822
        %v964 = vmul.f32 %v271, %v828
        %v965 = vmul.f32 %v272, %v828
        %v966 = vmul.f32 %v273, %v834
        %v967 = vmul.f32 %v274, %v834
        %v968 = vmul.f32 %v275, %v840
        %v969 = vmul.f32 %v276, %v840
        %v970 = vmul.f32 %v277, %v847
        %v971 = vmul.f32 %v278, %v847
        %v972 = vmul.f32 %v279, %v853
        %v973 = vmul.f32 %v280, %v853
        %v974 = vmul.f32 %v281, %v859
        %v975 = vmul.f32 %v282, %v859
        %v976 = vmul.f32 %v283, %v865
        %v977 = vmul.f32 %v284, %v865
        %v978 = vmul.f32 %v285, %v871
        %v979 = vmul.f32 %v286, %v871
        %v980 = vmul.f32 %v287, %v877
        %v981 = vmul.f32 %v288, %v877
        %v982 = vmul.f32 %v289, %v883
        %v983 = vmul.f32 %v290, %v883
        %v984 = vmul.f32 %v291, %v889
        %v985 = vmul.f32 %v292, %v889
        %v986 = vmul.f32 %v293, %v895
        %v987 = vmul.f32 %v294, %v895
        %v988 = vmul.f32 %v295, %v901
        %v989 = vmul.f32 %v296, %v901
        %v990 = vmul.f32 %v297, %v907
        %v991 = vmul.f32 %v298, %v907
        %v992 = vmul.f32 %v299, %v913
        %v993 = vmul.f32 %v300, %v913
        %v994 = vmul.f32 %v301, %v919
        %v995 = vmul.f32 %v302, %v919
        %v996 = vmul.f32 %v303, %v925
        %v997 = vmul.f32 %v304, %v925
        %v998 = vmul.f32 %v305, %v931
        %v999 = vmul.f32 %v306, %v931
        %v1000 = vmul.f32 %v307, %v937
        %v1001 = vmul.f32 %v308, %v937
        %1002 = vst [vmem:[%s244] sm:$0xff] %v938
        %1003 = vst [vmem:[%s244 + $0x8] sm:$0xff] %v939
        %1004 = vst [vmem:[%s244 + $0x10] sm:$0xff] %v940
        %1005 = vst [vmem:[%s244 + $0x18] sm:$0xff] %v941
        %1006 = vst [vmem:[%s244 + $0x20] sm:$0xff] %v942
        %1007 = vst [vmem:[%s244 + $0x28] sm:$0xff] %v943
        %1008 = vst [vmem:[%s244 + $0x30] sm:$0xff] %v944
        %1009 = vst [vmem:[%s244 + $0x38] sm:$0xff] %v945
        %1010 = vst [vmem:[%s244 + $0x40] sm:$0xff] %v946
        %1011 = vst [vmem:[%s244 + $0x48] sm:$0xff] %v947
        %1012 = vst [vmem:[%s244 + $0x50] sm:$0xff] %v948
        %1013 = vst [vmem:[%s244 + $0x58] sm:$0xff] %v949
        %1014 = vst [vmem:[%s244 + $0x60] sm:$0xff] %v950
        %1015 = vst [vmem:[%s244 + $0x68] sm:$0xff] %v951
        %1016 = vst [vmem:[%s244 + $0x70] sm:$0xff] %v952
        %1017 = vst [vmem:[%s244 + $0x78] sm:$0xff] %v953
        %1018 = vst [vmem:[%s244 + $0x80] sm:$0xff] %v954
        %1019 = vst [vmem:[%s244 + $0x88] sm:$0xff] %v955
        %1020 = vst [vmem:[%s244 + $0x90] sm:$0xff] %v956
        %1021 = vst [vmem:[%s244 + $0x98] sm:$0xff] %v957
        %1022 = vst [vmem:[%s244 + $0xa0] sm:$0xff] %v958
        %1023 = vst [vmem:[%s244 + $0xa8] sm:$0xff] %v959
        %1024 = vst [vmem:[%s244 + $0xb0] sm:$0xff] %v960
        %1025 = vst [vmem:[%s244 + $0xb8] sm:$0xff] %v961
        %1026 = vst [vmem:[%s244 + $0xc0] sm:$0xff] %v962
        %1027 = vst [vmem:[%s244 + $0xc8] sm:$0xff] %v963
        %1028 = vst [vmem:[%s244 + $0xd0] sm:$0xff] %v964
        %1029 = vst [vmem:[%s244 + $0xd8] sm:$0xff] %v965
        %1030 = vst [vmem:[%s244 + $0xe0] sm:$0xff] %v966
        %1031 = vst [vmem:[%s244 + $0xe8] sm:$0xff] %v967
        %1032 = vst [vmem:[%s244 + $0xf0] sm:$0xff] %v968
        %1033 = vst [vmem:[%s244 + $0xf8] sm:$0xff] %v969
        %1034 = vst [vmem:[%s244 + $0x100] sm:$0xff] %v970
        %1035 = vst [vmem:[%s244 + $0x108] sm:$0xff] %v971
        %1036 = vst [vmem:[%s244 + $0x110] sm:$0xff] %v972
        %1037 = vst [vmem:[%s244 + $0x118] sm:$0xff] %v973
        %1038 = vst [vmem:[%s244 + $0x120] sm:$0xff] %v974
        %1039 = vst [vmem:[%s244 + $0x128] sm:$0xff] %v975
        %1040 = vst [vmem:[%s244 + $0x130] sm:$0xff] %v976
        %1041 = vst [vmem:[%s244 + $0x138] sm:$0xff] %v977
        %1042 = vst [vmem:[%s244 + $0x140] sm:$0xff] %v978
        %1043 = vst [vmem:[%s244 + $0x148] sm:$0xff] %v979
        %1044 = vst [vmem:[%s244 + $0x150] sm:$0xff] %v980
        %1045 = vst [vmem:[%s244 + $0x158] sm:$0xff] %v981
        %1046 = vst [vmem:[%s244 + $0x160] sm:$0xff] %v982
        %1047 = vst [vmem:[%s244 + $0x168] sm:$0xff] %v983
        %1048 = vst [vmem:[%s244 + $0x170] sm:$0xff] %v984
        %1049 = vst [vmem:[%s244 + $0x178] sm:$0xff] %v985
        %1050 = vst [vmem:[%s244 + $0x180] sm:$0xff] %v986
        %1051 = vst [vmem:[%s244 + $0x188] sm:$0xff] %v987
        %1052 = vst [vmem:[%s244 + $0x190] sm:$0xff] %v988
        %1053 = vst [vmem:[%s244 + $0x198] sm:$0xff] %v989
        %1054 = vst [vmem:[%s244 + $0x1a0] sm:$0xff] %v990
        %1055 = vst [vmem:[%s244 + $0x1a8] sm:$0xff] %v991
        %1056 = vst [vmem:[%s244 + $0x1b0] sm:$0xff] %v992
        %1057 = vst [vmem:[%s244 + $0x1b8] sm:$0xff] %v993
        %1058 = vst [vmem:[%s244 + $0x1c0] sm:$0xff] %v994
        %1059 = vst [vmem:[%s244 + $0x1c8] sm:$0xff] %v995
        %1060 = vst [vmem:[%s244 + $0x1d0] sm:$0xff] %v996
        %1061 = vst [vmem:[%s244 + $0x1d8] sm:$0xff] %v997
        %1062 = vst [vmem:[%s244 + $0x1e0] sm:$0xff] %v998
        %1063 = vst [vmem:[%s244 + $0x1e8] sm:$0xff] %v999
        %1064 = vst [vmem:[%s244 + $0x1f0] sm:$0xff] %v1000
        %1065 = vst [vmem:[%s244 + $0x1f8] sm:$0xff] %v1001
        %s1066 = sand.u32 %s140, 1
        %s1067 = scalar_lea.sflag [#allocation4], %s1066
        %s1068 = sand.u32 %s140, 1
        %s1069 = smul.addr %s1068, 512
        %s1070 = scalar_lea.vmem [#allocation5], %s1069
        // Predicated region
        $region45: #{tpu_custom_call.1} parent=39 // pred_check
          %p1071 = pneg %p150
        $region46: #{tpu_custom_call.1} parent=39 // pred_check_branch
          %1073 = sbr.rel (%p1071) target = $region48
        $region47: #{tpu_custom_call.1} parent=39 // pred_region
          %1075 = vsyncadd %s1067, 0
          %s1076 = smul.addr %s22, 64
          %s1077 = smul.addr %s1076, 8
          %s1078 = scalar_lea.hbm %s5, %s1077
          %s1079 = sshll.u32 %s1070, 4
          %s1080 = int_to_ptr.vmem [resolvable:$true] %s1079
          %s1081 = sshll.u32 %s1078, 4
          %s1082 = int_to_ptr.hbm [resolvable:$true] %s1081
          %1087 = dma.vmem_to_hbm [thread:$0]  %s1080, 8192, %s1082, %s1067, 256, 256, 16
        $region48: #{tpu_custom_call.1} parent=39 // pred_fallthru
          _
      $region40: #{tpu_custom_call.1} parent=5 // pred_fallthru
        _
      %p1088 = scmp.le.s32.totalorder 2, %s17
      // Predicated region
      $region49: #{tpu_custom_call.1} parent=5 // pred_check
        %p1089 = pneg %p1088
      $region50: #{tpu_custom_call.1} parent=5 // pred_check_branch
        %1091 = sbr.rel (%p1089) target = $region52
      $region51: #{tpu_custom_call.1} parent=5 // pred_region
        %s1092 = ssub.s32 %s17, 2
        // Predicated region
        $region53: #{tpu_custom_call.1} parent=51 // pred_check
          %p1093 = pneg %p156
        $region54: #{tpu_custom_call.1} parent=51 // pred_check_branch
          %1095 = sbr.rel (%p1093) target = $region56
        $region55: #{tpu_custom_call.1} parent=51 // pred_region
          %s1096 = sand.u32 %s141, 1
          %s1097 = scalar_lea.sflag [#allocation4], %s1096
          %s1098 = sand.u32 %s141, 1
          %s1099 = smul.addr %s1098, 512
          %s1100 = scalar_lea.vmem [#allocation5], %s1099
          %1102 = dma.done %s1097, 8192
        $region56: #{tpu_custom_call.1} parent=51 // pred_fallthru
          _
      $region52: #{tpu_custom_call.1} parent=5 // pred_fallthru
        _
    $region6: #{tpu_custom_call.1} parent=1 // loop_footer
      %s21 = sadd.s32 1, %s17
    $region7: #{tpu_custom_call.1} parent=1 // loop_footer_branch
      %16 = sbr.rel target = $region3
    $region8: #{tpu_custom_call.1} parent=1 // loop_exit
      _
    %1103 = vsyncpa [#allocation3], 1
    %s1104 = scalar_lea.sflag [#allocation3], 1
    %1105 = vsyncpa %s1104, 1
    %1106 = vsyncpa [#allocation4], 1
    %s1107 = scalar_lea.sflag [#allocation4], 1
    %1108 = vsyncpa %s1107, 1

</llo_original>
